<compile_context>
chip_gen: v5e
topology: v5e:2x2
jax: 0.10.0
libtpu: 0.0.40
codegen_flags: <defaults>
</compile_context>

<pallas_src>
import functools

import jax
import jax.numpy as jnp
from jax import lax
from jax.experimental import pallas as pl
from jax.experimental.pallas import tpu as pltpu


# ----------------------------------------------------------------------------
# Kernels
# ----------------------------------------------------------------------------
def _tsm_copy_kernel(x_ref, o_ref, *, time_length, fold, hw, tb):
    """x_ref / o_ref: (tb, C*H*W) tile holding `tb` consecutive frames."""
    T = time_length
    b0 = pl.program_id(0) * tb           # global index of first frame in block
    t0 = b0 % T                          # its temporal index within the clip

    # Frames in this block cover t values {t0, ..., t0 + tb - 1} (mod T);
    # purely scalar arithmetic decides whether any masking is needed.
    has_first = ((T - t0) % T) < tb      # block contains a t == 0 frame
    has_last = (T - 1 - t0) < tb         # block contains a t == T-1 frame
    needs_mask = jnp.logical_or(has_first, has_last)

    @pl.when(jnp.logical_not(needs_mask))
    def _copy():
        # Common case (most blocks when tb < T): straight copy, zero VALU work.
        o_ref[...] = x_ref[...]

    @pl.when(needs_mask)
    def _masked():
        x = x_ref[...]
        # Small (tb, 1) row iota + (1, CHW) lane iota; broadcast in the select.
        t_row = (lax.broadcasted_iota(jnp.int32, (tb, 1), 0) + b0) % T
        col = lax.broadcasted_iota(jnp.int32, (1, x.shape[-1]), 1)
        zero_first = (t_row == 0) & (col < fold * hw)
        zero_last = ((t_row == T - 1)
                     & (col >= fold * hw) & (col < 2 * fold * hw))
        o_ref[...] = jnp.where(zero_first | zero_last,
                               jnp.zeros([], x.dtype), x)


def _tsm_zero_kernel(x_ref, o_ref):
    """Store zeros into the (1, fold*H*W) output slab.

    The input ref is only present because it is aliased to the output; all
    untouched data is preserved through input_output_aliases.
    """
    del x_ref
    o_ref[...] = jnp.zeros(o_ref.shape, o_ref.dtype)


# ----------------------------------------------------------------------------
# Wrappers
# ----------------------------------------------------------------------------
def tsm_forward(x, *, time_length=180, fold_div=3, block_bytes=2 * 1024 * 1024):
    """Full-copy Pallas TSM forward.  x: (B, C, H, W), B % time_length == 0."""
    B, C, H, W = x.shape
    assert B % time_length == 0, "B must be divisible by time_length"
    fold = C // fold_div
    HW = H * W
    CHW = C * HW

    # Frames-per-block: ~block_bytes per tile (with in+out double buffering
    # that is ~4x resident -> fits the default scoped-VMEM limit on every TPU
    # generation), shrunk to a divisor of B so the grid tiles exactly.  The
    # block's last two dims equal the full (tb, CHW) array dims, so the
    # (8, 128) tiling constraint is always satisfied, and the lane dim C*H*W
    # is large -> unmasked, lane-dense stores.
    row_bytes = CHW * x.dtype.itemsize
    tb = max(1, min(B, block_bytes // row_bytes))
    while B % tb != 0:
        tb -= 1
    num_blocks = B // tb

    x3 = x.reshape(num_blocks, tb, CHW)
    kernel = functools.partial(_tsm_copy_kernel, time_length=time_length,
                               fold=fold, hw=HW, tb=tb)

    out = pl.pallas_call(
        kernel,
        out_shape=jax.ShapeDtypeStruct((num_blocks, tb, CHW), x.dtype),
        grid=(num_blocks,),
        in_specs=[pl.BlockSpec((None, tb, CHW), lambda i: (i, 0, 0))],
        out_specs=pl.BlockSpec((None, tb, CHW), lambda i: (i, 0, 0)),
        compiler_params=pltpu.CompilerParams(
            dimension_semantics=("parallel",)),
    )(x3)
    return out.reshape(B, C, H, W)


def tsm_forward_inplace(x, *, time_length=180, fold_div=3):
    """Aliased Pallas TSM forward (minimal-traffic variant).

    Only the 2*N affected (frame, channel-slab) regions are written (zeros);
    everything else is carried through the input->output aliasing.  For the
    full bandwidth benefit the caller should donate x; otherwise XLA inserts
    one defensive copy and x stays valid.
    """
    B, C, H, W = x.shape
    assert B % time_length == 0, "B must be divisible by time_length"
    T = time_length
    N = B // T
    fold = C // fold_div
    HW = H * W
    CHW = C * HW
    if fold == 0:
        return x  # nothing is zeroed; identity

    x2 = x.reshape(B, CHW)
    slab = fold * HW  # width of one zeroed channel slab in the flat layout

    out = pl.pallas_call(
        _tsm_zero_kernel,
        out_shape=jax.ShapeDtypeStruct((B, CHW), x.dtype),
        grid=(N, 2),
        # e == 0: frame n*T,       columns [0, slab)       (channels [0, fold))
        # e == 1: frame n*T + T-1, columns [slab, 2*slab)  (channels [fold, 2*fold))
        in_specs=[pl.BlockSpec((1, slab),
                               lambda n, e: (n * T + e * (T - 1), e))],
        out_specs=pl.BlockSpec((1, slab),
                               lambda n, e: (n * T + e * (T - 1), e)),
        input_output_aliases={0: 0},
        compiler_params=pltpu.CompilerParams(
            dimension_semantics=("parallel", "parallel")),
    )(x2)
    return out.reshape(B, C, H, W)


# ----------------------------------------------------------------------------
# Pure-JAX reference (mirrors the PyTorch module exactly)
# ----------------------------------------------------------------------------
def tsm_reference(x, *, time_length=180, fold_div=3):
    B, C, H, W = x.shape
    N = B // time_length
    x5 = x.reshape(N, time_length, C, H, W)
    fold = C // fold_div
    last_fold = C - (fold_div - 1) * fold
    out1 = x5[:, :, :fold]
    out2 = x5[:, :, fold:2 * fold]
    out3 = x5[:, :, 2 * fold:2 * fold + last_fold]
    zeros1 = jnp.zeros((N, 1, fold, H, W), dtype=x.dtype)
    up_out1 = jnp.concatenate([zeros1, out1[:, 1:]], axis=1)
    down_out2 = jnp.concatenate([out2[:, :-1], zeros1], axis=1)
    bidir = jnp.concatenate([up_out1, down_out2, out3], axis=2)
    return bidir.reshape(B, C, H, W)


if __name__ == "__main__":
    # Small shapes consistent with the module: time_length=4, fold_div=3,
    # 2 clips -> B = 2*4 = 8 frames, C = 6 channels, H = W = 16.
    TIME_LENGTH = 4
    FOLD_DIV = 3
    N, C, H, W = 2, 6, 16, 16
    B = N * TIME_LENGTH

    key = jax.random.PRNGKey(0)
    x = jax.random.normal(key, (B, C, H, W), dtype=jnp.float32)

    ref = tsm_reference(x, time_length=TIME_LENGTH, fold_div=FOLD_DIV)

    out = jax.block_until_ready(
        tsm_forward(x, time_length=TIME_LENGTH, fold_div=FOLD_DIV))
    assert out.shape == (B, C, H, W) and out.dtype == x.dtype
    assert jnp.array_equal(out, ref), "copy-path mismatch vs reference"

    out2 = jax.block_until_ready(
        tsm_forward_inplace(x, time_length=TIME_LENGTH, fold_div=FOLD_DIV))
    assert out2.shape == (B, C, H, W) and out2.dtype == x.dtype
    assert jnp.array_equal(out2, ref), "in-place path mismatch vs reference"

    print("KERNEL_OK")
</pallas_src>

<mosaic_0001>
module attributes {stable_mosaic.version = 11 : i64} {
  func.func @_tsm_copy_kernel(%arg0: i32, %arg1: memref<1x8x1536xf32, #tpu.memory_space<vmem>>, %arg2: memref<1x8x1536xf32, #tpu.memory_space<vmem>>) attributes {dimension_semantics = [#tpu.dimension_semantics<parallel>], iteration_bounds = array<i64: 1>, scalar_prefetch = 0 : i64, scratch_operands = 0 : i64, tpu.core_type = #tpu.core_type<tc>, window_params = [{transform_indices = @transform_0, window_bounds = array<i64: 1, 8, 1536>}, {transform_indices = @transform_1, window_bounds = array<i64: 1, 8, 1536>}]} {
    %c8_i32 = arith.constant 8 : i32
    %0 = arith.muli %arg0, %c8_i32 : i32
    %c4_i32 = arith.constant 4 : i32
    %c0_i32 = arith.constant 0 : i32
    %1 = arith.cmpi eq, %c4_i32, %c0_i32 : i32
    %c1_i32 = arith.constant 1 : i32
    %2 = arith.select %1, %c1_i32, %c4_i32 : i32
    %3 = arith.remsi %0, %2 : i32
    %c0_i32_0 = arith.constant 0 : i32
    %4 = arith.cmpi ne, %3, %c0_i32_0 : i32
    %c0_i32_1 = arith.constant 0 : i32
    %5 = arith.cmpi slt, %3, %c0_i32_1 : i32
    %c0_i32_2 = arith.constant 0 : i32
    %6 = arith.cmpi slt, %2, %c0_i32_2 : i32
    %7 = arith.xori %5, %6 : i1
    %8 = arith.andi %7, %4 : i1
    %9 = arith.addi %3, %2 : i32
    %10 = arith.select %8, %9, %3 : i32
    %c4_i32_3 = arith.constant 4 : i32
    %11 = arith.subi %c4_i32_3, %10 : i32
    %c4_i32_4 = arith.constant 4 : i32
    %c0_i32_5 = arith.constant 0 : i32
    %12 = arith.cmpi eq, %c4_i32_4, %c0_i32_5 : i32
    %c1_i32_6 = arith.constant 1 : i32
    %13 = arith.select %12, %c1_i32_6, %c4_i32_4 : i32
    %14 = arith.remsi %11, %13 : i32
    %c0_i32_7 = arith.constant 0 : i32
    %15 = arith.cmpi ne, %14, %c0_i32_7 : i32
    %c0_i32_8 = arith.constant 0 : i32
    %16 = arith.cmpi slt, %14, %c0_i32_8 : i32
    %c0_i32_9 = arith.constant 0 : i32
    %17 = arith.cmpi slt, %13, %c0_i32_9 : i32
    %18 = arith.xori %16, %17 : i1
    %19 = arith.andi %18, %15 : i1
    %20 = arith.addi %14, %13 : i32
    %21 = arith.select %19, %20, %14 : i32
    %c8_i32_10 = arith.constant 8 : i32
    %22 = arith.cmpi slt, %21, %c8_i32_10 : i32
    %c3_i32 = arith.constant 3 : i32
    %23 = arith.subi %c3_i32, %10 : i32
    %c8_i32_11 = arith.constant 8 : i32
    %24 = arith.cmpi slt, %23, %c8_i32_11 : i32
    %25 = arith.ori %22, %24 : i1
    %true = arith.constant true
    %26 = arith.xori %25, %true : i1
    %27 = arith.extui %26 : i1 to i32
    %c0_i32_12 = arith.constant 0 : i32
    %28 = arith.cmpi ne, %27, %c0_i32_12 : i32
    scf.if %28 {
      %c0 = arith.constant 0 : index
      %c0_14 = arith.constant 0 : index
      %c0_15 = arith.constant 0 : index
      %31 = vector.load %arg1[%c0, %c0_14, %c0_15] : memref<1x8x1536xf32, #tpu.memory_space<vmem>>, vector<1x8x1536xf32>
      %32 = vector.shape_cast %31 : vector<1x8x1536xf32> to vector<8x1536xf32>
      %c0_16 = arith.constant 0 : index
      %c0_17 = arith.constant 0 : index
      %c0_18 = arith.constant 0 : index
      %33 = vector.load %arg2[%c0_16, %c0_17, %c0_18] : memref<1x8x1536xf32, #tpu.memory_space<vmem>>, vector<1x8x1536xf32>
      %34 = vector.shape_cast %33 : vector<1x8x1536xf32> to vector<8x1536xf32>
      %35 = vector.shape_cast %32 : vector<8x1536xf32> to vector<1x8x1536xf32>
      tpu.vector_store %arg2[%c0_16, %c0_17, %c0_18], %35 {strides = array<i32>} : memref<1x8x1536xf32, #tpu.memory_space<vmem>>, vector<1x8x1536xf32>,
    } else {
    }
    %29 = arith.extui %25 : i1 to i32
    %c0_i32_13 = arith.constant 0 : i32
    %30 = arith.cmpi ne, %29, %c0_i32_13 : i32
    scf.if %30 {
      %c0 = arith.constant 0 : index
      %c0_14 = arith.constant 0 : index
      %c0_15 = arith.constant 0 : index
      %31 = vector.load %arg1[%c0, %c0_14, %c0_15] : memref<1x8x1536xf32, #tpu.memory_space<vmem>>, vector<1x8x1536xf32>
      %32 = vector.shape_cast %31 : vector<1x8x1536xf32> to vector<8x1536xf32>
      %33 = tpu.iota {dimensions = array<i32: 0>} : vector<8x1xi32>
      %34 = vector.broadcast %0 : i32 to vector<8x1xi32>
      %35 = arith.addi %33, %34 : vector<8x1xi32>
      %c4_i32_16 = arith.constant 4 : i32
      %c0_i32_17 = arith.constant 0 : i32
      %36 = arith.cmpi eq, %c4_i32_16, %c0_i32_17 : i32
      %c1_i32_18 = arith.constant 1 : i32
      %37 = arith.select %36, %c1_i32_18, %c4_i32_16 : i32
      %38 = vector.broadcast %37 : i32 to vector<8x1xi32>
      %39 = arith.remsi %35, %38 : vector<8x1xi32>
      %c0_i32_19 = arith.constant 0 : i32
      %40 = vector.broadcast %c0_i32_19 : i32 to vector<8x1xi32>
      %41 = arith.cmpi ne, %39, %40 : vector<8x1xi32>
      %c0_i32_20 = arith.constant 0 : i32
      %42 = vector.broadcast %c0_i32_20 : i32 to vector<8x1xi32>
      %43 = arith.cmpi slt, %39, %42 : vector<8x1xi32>
      %c0_i32_21 = arith.constant 0 : i32
      %44 = arith.cmpi slt, %37, %c0_i32_21 : i32
      %45 = vector.broadcast %44 : i1 to vector<8x1xi1>
      %46 = vector.broadcast %45 : vector<8x1xi1> to vector<8x1xi1>
      %47 = arith.xori %43, %46 : vector<8x1xi1>
      %48 = arith.andi %47, %41 : vector<8x1xi1>
      %49 = vector.broadcast %37 : i32 to vector<8x1xi32>
      %50 = arith.addi %39, %49 : vector<8x1xi32>
      %51 = arith.select %48, %50, %39 : vector<8x1xi1>, vector<8x1xi32>
      %52 = tpu.iota {dimensions = array<i32: 1>} : vector<1x1536xi32>
      %c0_i32_22 = arith.constant 0 : i32
      %53 = vector.broadcast %c0_i32_22 : i32 to vector<8x1xi32>
      %54 = arith.cmpi eq, %51, %53 : vector<8x1xi32>
      %c512_i32 = arith.constant 512 : i32
      %55 = vector.broadcast %c512_i32 : i32 to vector<1x1536xi32>
      %56 = arith.cmpi slt, %52, %55 : vector<1x1536xi32>
      %57 = vector.broadcast %54 : vector<8x1xi1> to vector<8x1536xi1>
      %58 = vector.broadcast %56 : vector<1x1536xi1> to vector<8x1536xi1>
      %59 = arith.andi %57, %58 : vector<8x1536xi1>
      %c3_i32_23 = arith.constant 3 : i32
      %60 = vector.broadcast %c3_i32_23 : i32 to vector<8x1xi32>
      %61 = arith.cmpi eq, %51, %60 : vector<8x1xi32>
      %c512_i32_24 = arith.constant 512 : i32
      %62 = vector.broadcast %c512_i32_24 : i32 to vector<1x1536xi32>
      %63 = arith.cmpi sge, %52, %62 : vector<1x1536xi32>
      %64 = vector.broadcast %61 : vector<8x1xi1> to vector<8x1536xi1>
      %65 = vector.broadcast %63 : vector<1x1536xi1> to vector<8x1536xi1>
      %66 = arith.andi %64, %65 : vector<8x1536xi1>
      %c1024_i32 = arith.constant 1024 : i32
      %67 = vector.broadcast %c1024_i32 : i32 to vector<1x1536xi32>
      %68 = arith.cmpi slt, %52, %67 : vector<1x1536xi32>
      %69 = vector.broadcast %68 : vector<1x1536xi1> to vector<8x1536xi1>
      %70 = arith.andi %66, %69 : vector<8x1536xi1>
      %71 = arith.ori %59, %70 : vector<8x1536xi1>
      %cst = arith.constant 0.000000e+00 : f32
      %72 = vector.broadcast %cst : f32 to vector<8x1536xf32>
      %73 = arith.select %71, %72, %32 : vector<8x1536xi1>, vector<8x1536xf32>
      %c0_25 = arith.constant 0 : index
      %c0_26 = arith.constant 0 : index
      %c0_27 = arith.constant 0 : index
      %74 = vector.load %arg2[%c0_25, %c0_26, %c0_27] : memref<1x8x1536xf32, #tpu.memory_space<vmem>>, vector<1x8x1536xf32>
      %75 = vector.shape_cast %74 : vector<1x8x1536xf32> to vector<8x1536xf32>
      %76 = vector.shape_cast %73 : vector<8x1536xf32> to vector<1x8x1536xf32>
      tpu.vector_store %arg2[%c0_25, %c0_26, %c0_27], %76 {strides = array<i32>} : memref<1x8x1536xf32, #tpu.memory_space<vmem>>, vector<1x8x1536xf32>,
    } else {
    }
    return
  }
  func.func @transform_0(%arg0: i32) -> (i32, i32, i32) {
    %c0_i32 = arith.constant 0 : i32
    %c0_i32_0 = arith.constant 0 : i32
    %c0_i32_1 = arith.constant 0 : i32
    return %arg0, %c0_i32, %c0_i32_0 : i32, i32, i32
  }
  func.func @transform_1(%arg0: i32) -> (i32, i32, i32) {
    %c0_i32 = arith.constant 0 : i32
    %c0_i32_0 = arith.constant 0 : i32
    %c0_i32_1 = arith.constant 0 : i32
    return %arg0, %c0_i32, %c0_i32_0 : i32, i32, i32
  }
}

</mosaic_0001>

<llo_original>
// kernel: tpu_custom_call.1
$region0: #{tpu_custom_call.1}
  #allocation0 [shape = 'u32[]', space=smem, size = 0x4, offset = 0x4, fixed_abs, tag = 'smem constant byte address 0x4 - core index']
  #allocation1 [shape = 'u32[72,128]{1,0:T(1,128)}', space=vmem, size = 0x9000, scoped, tag = 'internal scratch']
  %s0 = inlined_call_operand.hbm [shape: f32[1,8,1536], index: 0, kind: input, shape index: {}]
  %s1 = inlined_call_operand.hbm [shape: f32[1,8,1536], index: 1, kind: output, shape index: {}]
  %s2 = sld [smem:[#allocation0]]
  $region26: #{tpu_custom_call.1} parent=0
    _
  %s4 = ssub.s32 1, %s2
  %s5 = scalar_select 0, %s4, %s2
  $region1: #{tpu_custom_call.1} parent=0
    #allocation2 [shape = 'u8[49152]{0}', space=vmem, size = 0xc000, scoped, tag = 'input window, operand 0, single buffered']
    #allocation3 [shape = 's32[1]{0}', space=sflag, size = 0x4, scoped, tag = 'scoped memory for tpu_custom_call.1']
    #allocation4 [shape = 's32[1]{0}', space=sflag, size = 0x4, scoped, tag = 'scoped memory for tpu_custom_call.1']
    #allocation5 [shape = 'u8[49152]{0}', space=vmem, size = 0xc000, scoped, tag = 'output window, operand 0, single buffered']
    %6 = vsyncpa [#allocation3], 0
    %7 = vsyncpa [#allocation4], 0
    // Predicated region
    $region2: #{tpu_custom_call.1} parent=1 // pred_check
      _
    $region3: #{tpu_custom_call.1} parent=1 // pred_check_branch
      %9 = sbr.rel (0) target = $region5
    $region4: #{tpu_custom_call.1} parent=1 // pred_region
      %11 = vsyncadd [#allocation3], 0
      %s13 = sshll.u32 %s0, 4
      %s14 = int_to_ptr.hbm [resolvable:$true] %s13
      %s15 = sshll.u32 [#allocation2], 4
      %s16 = int_to_ptr.vmem [resolvable:$true] %s15
      %18 = dma.hbm_to_vmem [thread:$0]  %s14, 1536, %s16, [#allocation3]
    $region5: #{tpu_custom_call.1} parent=1 // pred_fallthru
      _
    // Predicated region
    $region6: #{tpu_custom_call.1} parent=1 // pred_check
      _
    $region7: #{tpu_custom_call.1} parent=1 // pred_check_branch
      %20 = sbr.rel (0) target = $region9
    $region8: #{tpu_custom_call.1} parent=1 // pred_region
      %22 = dma.done [#allocation3], 1536
    $region9: #{tpu_custom_call.1} parent=1 // pred_fallthru
      _
    %s23 = smul.u32 0, 8
    %p24 = scmp.lt.s32.totalorder %s23, 0
    %s25 = ssub.s32 0, %s23
    %s26 = scalar_select %p24, %s25, %s23
    %s27 = sand.u32 %s26, 3
    %s28 = ssub.s32 0, %s27
    %s29 = scalar_select %p24, %s28, %s27
    %p30 = scmp.ne.s32.totalorder %s29, 0
    %p31 = scmp.lt.s32.totalorder %s29, 0
    %p32 = pnand %p31, %p30
    %p33 = pneg %p32
    %s34 = sadd.s32 %s29, 4
    %s35 = scalar_select %p33, %s34, %s29
    %s36 = ssub.s32 4, %s35
    %p37 = scmp.lt.s32.totalorder %s36, 0
    %s38 = ssub.s32 0, %s36
    %s39 = scalar_select %p37, %s38, %s36
    %s40 = sand.u32 %s39, 3
    %s41 = ssub.s32 0, %s40
    %s42 = scalar_select %p37, %s41, %s40
    %p43 = scmp.ne.s32.totalorder %s42, 0
    %p44 = scmp.lt.s32.totalorder %s42, 0
    %p45 = pnand %p44, %p43
    %p46 = pneg %p45
    %s47 = sadd.s32 %s42, 4
    %s48 = scalar_select %p46, %s47, %s42
    %p49 = scmp.lt.s32.totalorder %s48, 8
    %s50 = ssub.s32 3, %s35
    %p51 = scmp.lt.s32.totalorder %s50, 8
    %p52 = por %p49, %p51
    // Predicated region
    $region10: #{tpu_custom_call.1} parent=1 // pred_check
      %p53 = pneg %p52
    $region11: #{tpu_custom_call.1} parent=1 // pred_check_branch
      %55 = sbr.rel (%p53) target = $region13
    $region12: #{tpu_custom_call.1} parent=1 // pred_region
      %v56 = vld [vmem:[#allocation2] sm:$0xff]
      %v57 = vld [vmem:[#allocation2 + $0x8] sm:$0xff]
      %v58 = vld [vmem:[#allocation2 + $0x10] sm:$0xff]
      %v59 = vld [vmem:[#allocation2 + $0x18] sm:$0xff]
      %v60 = vld [vmem:[#allocation2 + $0x20] sm:$0xff]
      %v61 = vld [vmem:[#allocation2 + $0x28] sm:$0xff]
      %v62 = vld [vmem:[#allocation2 + $0x30] sm:$0xff]
      %v63 = vld [vmem:[#allocation2 + $0x38] sm:$0xff]
      %v64 = vld [vmem:[#allocation2 + $0x40] sm:$0xff]
      %v65 = vld [vmem:[#allocation2 + $0x48] sm:$0xff]
      %v66 = vld [vmem:[#allocation2 + $0x50] sm:$0xff]
      %v67 = vld [vmem:[#allocation2 + $0x58] sm:$0xff]
      %v68 = vlaneseq
      %v69 = vshrl.u32 %v68, 7
      %v70 = vstv %s23
      %v71 = vadd.s32 %v69, %v70
      %vm72 = vcmp.lt.s32.totalorder %v71, 0
      %v73 = vsub.s32 0, %v71
      %v74 = vsel %vm72, %v73, %v71
      %v75 = vshrl.u32 %v74, 2
      %v76 = vand.u32 %v74, 3
      %v77 = vsub.s32 0, %v76
      %v78 = vsel %vm72, %v77, %v76
      %vm79 = vcmp.ne.s32.totalorder %v78, 0
      %vm80 = vcmp.lt.s32.totalorder %v78, 0
      %vm81 = vmand %vm80, %vm79
      %v82 = vadd.s32 %v78, 4
      %v83 = vsel %vm81, %v82, %v78
      %v84 = vlaneseq
      %v85 = vand.u32 %v84, 127
      %v86 = vadd.s32 %v85, 128
      %v87 = vadd.s32 %v85, 256
      %v88 = vadd.s32 %v85, 384
      %v89 = vadd.s32 %v85, 512
      %v90 = vadd.s32 %v85, 640
      %v91 = vadd.s32 %v85, 768
      %v92 = vadd.s32 %v85, 896
      %v93 = vadd.s32 %v85, 1024
      %v94 = vadd.s32 %v85, 1152
      %v95 = vadd.s32 %v85, 1280
      %v96 = vadd.s32 %v85, 1408
      %vm97 = vcmp.eq.s32.totalorder %v83, 0
      %vm98 = vcmp.lt.s32.totalorder %v85, 512
      %vm99 = vcmp.lt.s32.totalorder %v86, 512
      %vm100 = vcmp.lt.s32.totalorder %v87, 512
      %vm101 = vcmp.lt.s32.totalorder %v88, 512
      %vm102 = vcmp.lt.s32.totalorder %v89, 512
      %vm103 = vcmp.lt.s32.totalorder %v90, 512
      %vm104 = vcmp.lt.s32.totalorder %v91, 512
      %vm105 = vcmp.lt.s32.totalorder %v92, 512
      %vm106 = vcmp.lt.s32.totalorder %v93, 512
      %vm107 = vcmp.lt.s32.totalorder %v94, 512
      %vm108 = vcmp.lt.s32.totalorder %v95, 512
      %vm109 = vcmp.lt.s32.totalorder %v96, 512
      %v110 = vsel %vm97, 1, 0
      %vm111 = vcmp.eq.s32.totalorder %v110, 1
      %v112 = vsel %vm98, 1, 0
      %v113 = vsel %vm99, 1, 0
      %v114 = vsel %vm100, 1, 0
      %v115 = vsel %vm101, 1, 0
      %v116 = vsel %vm102, 1, 0
      %v117 = vsel %vm103, 1, 0
      %v118 = vsel %vm104, 1, 0
      %v119 = vsel %vm105, 1, 0
      %v120 = vsel %vm106, 1, 0
      %v121 = vsel %vm107, 1, 0
      %v122 = vsel %vm108, 1, 0
      %v123 = vsel %vm109, 1, 0
      %vm124 = vcmp.eq.s32.totalorder %v112, 1
      %vm125 = vcmp.eq.s32.totalorder %v113, 1
      %vm126 = vcmp.eq.s32.totalorder %v114, 1
      %vm127 = vcmp.eq.s32.totalorder %v115, 1
      %vm128 = vcmp.eq.s32.totalorder %v116, 1
      %vm129 = vcmp.eq.s32.totalorder %v117, 1
      %vm130 = vcmp.eq.s32.totalorder %v118, 1
      %vm131 = vcmp.eq.s32.totalorder %v119, 1
      %vm132 = vcmp.eq.s32.totalorder %v120, 1
      %vm133 = vcmp.eq.s32.totalorder %v121, 1
      %vm134 = vcmp.eq.s32.totalorder %v122, 1
      %vm135 = vcmp.eq.s32.totalorder %v123, 1
      %vm136 = vmand %vm111, %vm124
      %vm137 = vmand %vm111, %vm125
      %vm138 = vmand %vm111, %vm126
      %vm139 = vmand %vm111, %vm127
      %vm140 = vmand %vm111, %vm128
      %vm141 = vmand %vm111, %vm129
      %vm142 = vmand %vm111, %vm130
      %vm143 = vmand %vm111, %vm131
      %vm144 = vmand %vm111, %vm132
      %vm145 = vmand %vm111, %vm133
      %vm146 = vmand %vm111, %vm134
      %vm147 = vmand %vm111, %vm135
      %vm148 = vcmp.eq.s32.totalorder %v83, 3
      %vm149 = vcmp.ge.s32.totalorder %v85, 512
      %vm150 = vcmp.ge.s32.totalorder %v86, 512
      %vm151 = vcmp.ge.s32.totalorder %v87, 512
      %vm152 = vcmp.ge.s32.totalorder %v88, 512
      %vm153 = vcmp.ge.s32.totalorder %v89, 512
      %vm154 = vcmp.ge.s32.totalorder %v90, 512
      %vm155 = vcmp.ge.s32.totalorder %v91, 512
      %vm156 = vcmp.ge.s32.totalorder %v92, 512
      %vm157 = vcmp.ge.s32.totalorder %v93, 512
      %vm158 = vcmp.ge.s32.totalorder %v94, 512
      %vm159 = vcmp.ge.s32.totalorder %v95, 512
      %vm160 = vcmp.ge.s32.totalorder %v96, 512
      %v161 = vsel %vm148, 1, 0
      %vm162 = vcmp.eq.s32.totalorder %v161, 1
      %v163 = vsel %vm149, 1, 0
      %v164 = vsel %vm150, 1, 0
      %v165 = vsel %vm151, 1, 0
      %v166 = vsel %vm152, 1, 0
      %v167 = vsel %vm153, 1, 0
      %v168 = vsel %vm154, 1, 0
      %v169 = vsel %vm155, 1, 0
      %v170 = vsel %vm156, 1, 0
      %v171 = vsel %vm157, 1, 0
      %v172 = vsel %vm158, 1, 0
      %v173 = vsel %vm159, 1, 0
      %v174 = vsel %vm160, 1, 0
      %vm175 = vcmp.eq.s32.totalorder %v163, 1
      %vm176 = vcmp.eq.s32.totalorder %v164, 1
      %vm177 = vcmp.eq.s32.totalorder %v165, 1
      %vm178 = vcmp.eq.s32.totalorder %v166, 1
      %vm179 = vcmp.eq.s32.totalorder %v167, 1
      %vm180 = vcmp.eq.s32.totalorder %v168, 1
      %vm181 = vcmp.eq.s32.totalorder %v169, 1
      %vm182 = vcmp.eq.s32.totalorder %v170, 1
      %vm183 = vcmp.eq.s32.totalorder %v171, 1
      %vm184 = vcmp.eq.s32.totalorder %v172, 1
      %vm185 = vcmp.eq.s32.totalorder %v173, 1
      %vm186 = vcmp.eq.s32.totalorder %v174, 1
      %vm187 = vmand %vm162, %vm175
      %vm188 = vmand %vm162, %vm176
      %vm189 = vmand %vm162, %vm177
      %vm190 = vmand %vm162, %vm178
      %vm191 = vmand %vm162, %vm179
      %vm192 = vmand %vm162, %vm180
      %vm193 = vmand %vm162, %vm181
      %vm194 = vmand %vm162, %vm182
      %vm195 = vmand %vm162, %vm183
      %vm196 = vmand %vm162, %vm184
      %vm197 = vmand %vm162, %vm185
      %vm198 = vmand %vm162, %vm186
      %vm199 = vcmp.lt.s32.totalorder %v85, 1024
      %vm200 = vcmp.lt.s32.totalorder %v86, 1024
      %vm201 = vcmp.lt.s32.totalorder %v87, 1024
      %vm202 = vcmp.lt.s32.totalorder %v88, 1024
      %vm203 = vcmp.lt.s32.totalorder %v89, 1024
      %vm204 = vcmp.lt.s32.totalorder %v90, 1024
      %vm205 = vcmp.lt.s32.totalorder %v91, 1024
      %vm206 = vcmp.lt.s32.totalorder %v92, 1024
      %vm207 = vcmp.lt.s32.totalorder %v93, 1024
      %vm208 = vcmp.lt.s32.totalorder %v94, 1024
      %vm209 = vcmp.lt.s32.totalorder %v95, 1024
      %vm210 = vcmp.lt.s32.totalorder %v96, 1024
      %v211 = vsel %vm199, 1, 0
      %v212 = vsel %vm200, 1, 0
      %v213 = vsel %vm201, 1, 0
      %v214 = vsel %vm202, 1, 0
      %v215 = vsel %vm203, 1, 0
      %v216 = vsel %vm204, 1, 0
      %v217 = vsel %vm205, 1, 0
      %v218 = vsel %vm206, 1, 0
      %v219 = vsel %vm207, 1, 0
      %v220 = vsel %vm208, 1, 0
      %v221 = vsel %vm209, 1, 0
      %v222 = vsel %vm210, 1, 0
      %vm223 = vcmp.eq.s32.totalorder %v211, 1
      %vm224 = vcmp.eq.s32.totalorder %v212, 1
      %vm225 = vcmp.eq.s32.totalorder %v213, 1
      %vm226 = vcmp.eq.s32.totalorder %v214, 1
      %vm227 = vcmp.eq.s32.totalorder %v215, 1
      %vm228 = vcmp.eq.s32.totalorder %v216, 1
      %vm229 = vcmp.eq.s32.totalorder %v217, 1
      %vm230 = vcmp.eq.s32.totalorder %v218, 1
      %vm231 = vcmp.eq.s32.totalorder %v219, 1
      %vm232 = vcmp.eq.s32.totalorder %v220, 1
      %vm233 = vcmp.eq.s32.totalorder %v221, 1
      %vm234 = vcmp.eq.s32.totalorder %v222, 1
      %vm235 = vmand %vm187, %vm223
      %vm236 = vmand %vm188, %vm224
      %vm237 = vmand %vm189, %vm225
      %vm238 = vmand %vm190, %vm226
      %vm239 = vmand %vm191, %vm227
      %vm240 = vmand %vm192, %vm228
      %vm241 = vmand %vm193, %vm229
      %vm242 = vmand %vm194, %vm230
      %vm243 = vmand %vm195, %vm231
      %vm244 = vmand %vm196, %vm232
      %vm245 = vmand %vm197, %vm233
      %vm246 = vmand %vm198, %vm234
      %vm247 = vmor %vm136, %vm235
      %vm248 = vmor %vm137, %vm236
      %vm249 = vmor %vm138, %vm237
      %vm250 = vmor %vm139, %vm238
      %vm251 = vmor %vm140, %vm239
      %vm252 = vmor %vm141, %vm240
      %vm253 = vmor %vm142, %vm241
      %vm254 = vmor %vm143, %vm242
      %vm255 = vmor %vm144, %vm243
      %vm256 = vmor %vm145, %vm244
      %vm257 = vmor %vm146, %vm245
      %vm258 = vmor %vm147, %vm246
      %v259 = vsel %vm247, 0.0, %v56
      %v260 = vsel %vm248, 0.0, %v57
      %v261 = vsel %vm249, 0.0, %v58
      %v262 = vsel %vm250, 0.0, %v59
      %v263 = vsel %vm251, 0.0, %v60
      %v264 = vsel %vm252, 0.0, %v61
      %v265 = vsel %vm253, 0.0, %v62
      %v266 = vsel %vm254, 0.0, %v63
      %v267 = vsel %vm255, 0.0, %v64
      %v268 = vsel %vm256, 0.0, %v65
      %v269 = vsel %vm257, 0.0, %v66
      %v270 = vsel %vm258, 0.0, %v67
      %271 = vst [vmem:[#allocation5] sm:$0xff] %v259
      %272 = vst [vmem:[#allocation5 + $0x8] sm:$0xff] %v260
      %273 = vst [vmem:[#allocation5 + $0x10] sm:$0xff] %v261
      %274 = vst [vmem:[#allocation5 + $0x18] sm:$0xff] %v262
      %275 = vst [vmem:[#allocation5 + $0x20] sm:$0xff] %v263
      %276 = vst [vmem:[#allocation5 + $0x28] sm:$0xff] %v264
      %277 = vst [vmem:[#allocation5 + $0x30] sm:$0xff] %v265
      %278 = vst [vmem:[#allocation5 + $0x38] sm:$0xff] %v266
      %279 = vst [vmem:[#allocation5 + $0x40] sm:$0xff] %v267
      %280 = vst [vmem:[#allocation5 + $0x48] sm:$0xff] %v268
      %281 = vst [vmem:[#allocation5 + $0x50] sm:$0xff] %v269
      %282 = vst [vmem:[#allocation5 + $0x58] sm:$0xff] %v270
    $region13: #{tpu_custom_call.1} parent=1 // pred_fallthru
      _
    %p283 = pneg %p52
    // Predicated region
    $region14: #{tpu_custom_call.1} parent=1 // pred_check
      _
    $region15: #{tpu_custom_call.1} parent=1 // pred_check_branch
      %285 = sbr.rel (%p52) target = $region17
    $region16: #{tpu_custom_call.1} parent=1 // pred_region
      %v286 = vld [vmem:[#allocation2] sm:$0xff]
      %v287 = vld [vmem:[#allocation2 + $0x8] sm:$0xff]
      %v288 = vld [vmem:[#allocation2 + $0x10] sm:$0xff]
      %v289 = vld [vmem:[#allocation2 + $0x18] sm:$0xff]
      %v290 = vld [vmem:[#allocation2 + $0x20] sm:$0xff]
      %v291 = vld [vmem:[#allocation2 + $0x28] sm:$0xff]
      %v292 = vld [vmem:[#allocation2 + $0x30] sm:$0xff]
      %v293 = vld [vmem:[#allocation2 + $0x38] sm:$0xff]
      %v294 = vld [vmem:[#allocation2 + $0x40] sm:$0xff]
      %v295 = vld [vmem:[#allocation2 + $0x48] sm:$0xff]
      %v296 = vld [vmem:[#allocation2 + $0x50] sm:$0xff]
      %v297 = vld [vmem:[#allocation2 + $0x58] sm:$0xff]
      %298 = vst [vmem:[#allocation5] sm:$0xff] %v286
      %299 = vst [vmem:[#allocation5 + $0x8] sm:$0xff] %v287
      %300 = vst [vmem:[#allocation5 + $0x10] sm:$0xff] %v288
      %301 = vst [vmem:[#allocation5 + $0x18] sm:$0xff] %v289
      %302 = vst [vmem:[#allocation5 + $0x20] sm:$0xff] %v290
      %303 = vst [vmem:[#allocation5 + $0x28] sm:$0xff] %v291
      %304 = vst [vmem:[#allocation5 + $0x30] sm:$0xff] %v292
      %305 = vst [vmem:[#allocation5 + $0x38] sm:$0xff] %v293
      %306 = vst [vmem:[#allocation5 + $0x40] sm:$0xff] %v294
      %307 = vst [vmem:[#allocation5 + $0x48] sm:$0xff] %v295
      %308 = vst [vmem:[#allocation5 + $0x50] sm:$0xff] %v296
      %309 = vst [vmem:[#allocation5 + $0x58] sm:$0xff] %v297
    $region17: #{tpu_custom_call.1} parent=1 // pred_fallthru
      _
    // Predicated region
    $region18: #{tpu_custom_call.1} parent=1 // pred_check
      _
    $region19: #{tpu_custom_call.1} parent=1 // pred_check_branch
      %311 = sbr.rel (0) target = $region21
    $region20: #{tpu_custom_call.1} parent=1 // pred_region
      %313 = vsyncadd [#allocation4], 0
      %s315 = sshll.u32 [#allocation5], 4
      %s316 = int_to_ptr.vmem [resolvable:$true] %s315
      %s317 = sshll.u32 %s1, 4
      %s318 = int_to_ptr.hbm [resolvable:$true] %s317
      %320 = dma.vmem_to_hbm [thread:$0]  %s316, 1536, %s318, [#allocation4]
    $region21: #{tpu_custom_call.1} parent=1 // pred_fallthru
      _
    // Predicated region
    $region22: #{tpu_custom_call.1} parent=1 // pred_check
      _
    $region23: #{tpu_custom_call.1} parent=1 // pred_check_branch
      %322 = sbr.rel (0) target = $region25
    $region24: #{tpu_custom_call.1} parent=1 // pred_region
      %324 = dma.done [#allocation4], 1536
    $region25: #{tpu_custom_call.1} parent=1 // pred_fallthru
      _
    %325 = vsyncpa [#allocation3], 1
    %326 = vsyncpa [#allocation4], 1

</llo_original>
